<compile_context>
chip_gen: v5e
topology: v5e:2x2
jax: 0.10.0
libtpu: 0.0.40
codegen_flags: <defaults>
</compile_context>

<pallas_src>
import functools

import jax
import jax.numpy as jnp
from jax.experimental import pallas as pl
from jax.experimental.pallas import tpu as pltpu

BN_EPS = 1e-5
VMEM_LIMIT = 32 * 1024 * 1024        # explicit, safe on v5e/v6e/v7x
TM_TARGET = 8192                     # lanes of M per tile (multiple of 128)


def _round_up(a, b):
    return ((a + b - 1) // b) * b


def conv_stats_kernel(p_ref, w_ref, conv_ref, sum_ref, ssq_ref):
    """Pass 1: conv tile (MXU, bf16 operands, f32 accumulate) + BN sum / sum-of-squares.

    p_ref   : (KC, TM)  bf16   im2col tile, M on lanes (lane-dense)
    w_ref   : (Cout, KC) bf16  conv weight, (ky,kx,cin) contraction axis
    conv_ref: (Cout, TM) f32   conv output tile (lane-dense stores)
    sum_ref : (Cout, 1)  f32   per-channel sum accumulator   (same block every step)
    ssq_ref : (Cout, 1)  f32   per-channel sum-of-squares accumulator
    """
    conv = jnp.dot(w_ref[...], p_ref[...], preferred_element_type=jnp.float32)
    conv_ref[...] = conv

    @pl.when(pl.program_id(0) == 0)
    def _init():
        sum_ref[...] = jnp.zeros_like(sum_ref)
        ssq_ref[...] = jnp.zeros_like(ssq_ref)

    sum_ref[...] += jnp.sum(conv, axis=1, keepdims=True)
    ssq_ref[...] += jnp.sum(conv * conv, axis=1, keepdims=True)


def bn_relu_kernel(conv_ref, sum_ref, ssq_ref, gamma_ref, beta_ref, o_ref, *, inv_count):
    """Pass 2: BatchNorm (train-mode batch stats) + ReLU, fused into one FMA per element."""
    mean = sum_ref[...] * inv_count                       # (Cout, 1)
    var = ssq_ref[...] * inv_count - mean * mean          # biased batch variance
    scale = jax.lax.rsqrt(var + BN_EPS) * gamma_ref[...]  # (Cout, 1)
    shift = beta_ref[...] - mean * scale
    o_ref[...] = jnp.maximum(conv_ref[...] * scale + shift, 0.0)


def down_single_conv(x, w, gamma, beta):
    """x: (N, Cin, H, W) NCHW f32; w: (Cout, Cin, 3, 3); gamma/beta: (Cout,)."""
    N, Cin, H, W = x.shape
    Cout = w.shape[0]
    Ho, Wo = H // 2, W // 2
    M = N * Ho * Wo
    KC = 9 * Cin

    # --- AvgPool2d(2): pure reshape + mean in the wrapper (review option (a)) ----------
    pooled = x.astype(jnp.float32).reshape(N, Cin, Ho, 2, Wo, 2).mean(axis=(3, 5))

    # --- im2col of the pooled tensor, transposed to (KC, M) so M rides the lanes -------
    gp = jnp.pad(pooled, ((0, 0), (0, 0), (1, 1), (1, 1)))          # zero pad for 3x3 conv
    cols = [gp[:, :, dy:dy + Ho, dx:dx + Wo] for dy in range(3) for dx in range(3)]
    patches_t = (jnp.stack(cols, axis=0)                            # (9, N, Cin, Ho, Wo)
                 .transpose(0, 2, 1, 3, 4)                          # (9, Cin, N, Ho, Wo)
                 .reshape(KC, M))                                   # (KC, M)

    # Conv weight (Cout, Cin, ky, kx) -> (Cout, ky, kx, Cin) -> (Cout, 9*Cin)
    w2d = jnp.transpose(w, (0, 2, 3, 1)).reshape(Cout, KC)

    # --- tile sizes / padding of M to a whole number of lane-dense tiles ---------------
    TM = min(TM_TARGET, _round_up(M, 128))
    M_pad = _round_up(M, TM)
    if M_pad != M:
        # zero columns contribute 0 to both sum and sum-of-squares; divisor uses real M.
        patches_t = jnp.pad(patches_t, ((0, 0), (0, M_pad - M)))
    num_tiles = M_pad // TM

    patches_bf16 = patches_t.astype(jnp.bfloat16)
    w_bf16 = w2d.astype(jnp.bfloat16)
    gamma2 = gamma.reshape(Cout, 1).astype(jnp.float32)
    beta2 = beta.reshape(Cout, 1).astype(jnp.float32)

    # --- pass 1: conv + per-channel sum / sum-of-squares (accumulator over M tiles) ----
    conv_t, csum, cssq = pl.pallas_call(
        conv_stats_kernel,
        out_shape=(
            jax.ShapeDtypeStruct((Cout, M_pad), jnp.float32),
            jax.ShapeDtypeStruct((Cout, 1), jnp.float32),
            jax.ShapeDtypeStruct((Cout, 1), jnp.float32),
        ),
        grid=(num_tiles,),
        in_specs=[
            pl.BlockSpec((KC, TM), lambda i: (0, i)),
            pl.BlockSpec((Cout, KC), lambda i: (0, 0)),
        ],
        out_specs=(
            pl.BlockSpec((Cout, TM), lambda i: (0, i)),
            pl.BlockSpec((Cout, 1), lambda i: (0, 0)),
            pl.BlockSpec((Cout, 1), lambda i: (0, 0)),
        ),
        compiler_params=pltpu.CompilerParams(
            dimension_semantics=("arbitrary",),      # stats accumulate across M tiles
            vmem_limit_bytes=VMEM_LIMIT),
    )(patches_bf16, w_bf16)

    # --- pass 2: BatchNorm normalize + ReLU over M tiles (parallel across cores) -------
    out_t = pl.pallas_call(
        functools.partial(bn_relu_kernel, inv_count=1.0 / M),
        out_shape=jax.ShapeDtypeStruct((Cout, M_pad), jnp.float32),
        grid=(num_tiles,),
        in_specs=[
            pl.BlockSpec((Cout, TM), lambda i: (0, i)),
            pl.BlockSpec((Cout, 1), lambda i: (0, 0)),
            pl.BlockSpec((Cout, 1), lambda i: (0, 0)),
            pl.BlockSpec((Cout, 1), lambda i: (0, 0)),
            pl.BlockSpec((Cout, 1), lambda i: (0, 0)),
        ],
        out_specs=pl.BlockSpec((Cout, TM), lambda i: (0, i)),
        compiler_params=pltpu.CompilerParams(
            dimension_semantics=("parallel",),
            vmem_limit_bytes=VMEM_LIMIT),
    )(conv_t, csum, cssq, gamma2, beta2)

    # --- back to NCHW (indexing only) ---------------------------------------------------
    out = out_t[:, :M].reshape(Cout, N, Ho, Wo)
    return jnp.transpose(out, (1, 0, 2, 3))


def reference(x, w, gamma, beta):
    """Pure-JAX f32 reference of DownSingleConv.forward (training-mode BN)."""
    N, Cin, H, W = x.shape
    Ho, Wo = H // 2, W // 2
    pooled = x.reshape(N, Cin, Ho, 2, Wo, 2).mean(axis=(3, 5))
    conv = jax.lax.conv_general_dilated(
        pooled, w, window_strides=(1, 1), padding="SAME",
        dimension_numbers=("NCHW", "OIHW", "NCHW"))
    mean = conv.mean(axis=(0, 2, 3), keepdims=True)
    var = ((conv - mean) ** 2).mean(axis=(0, 2, 3), keepdims=True)
    y = (conv - mean) * jax.lax.rsqrt(var + BN_EPS)
    y = y * gamma.reshape(1, -1, 1, 1) + beta.reshape(1, -1, 1, 1)
    return jnp.maximum(y, 0.0)


if __name__ == "__main__":
    N, Cin, H, W = 2, 4, 16, 16
    Cout = 8

    key = jax.random.PRNGKey(0)
    k1, k2, k3, k4 = jax.random.split(key, 4)
    x = jax.random.normal(k1, (N, Cin, H, W), jnp.float32)
    w = jax.random.normal(k2, (Cout, Cin, 3, 3), jnp.float32) * 0.1
    gamma = 1.0 + 0.1 * jax.random.normal(k3, (Cout,), jnp.float32)
    beta = 0.1 * jax.random.normal(k4, (Cout,), jnp.float32)

    y = jax.block_until_ready(down_single_conv(x, w, gamma, beta))

    y_ref = reference(x, w, gamma, beta)
    assert y.shape == (N, Cout, H // 2, W // 2)
    # bf16 matmul operands (kernel) vs. all-f32 reference -> loose tolerance.
    assert jnp.allclose(y, y_ref, atol=5e-2, rtol=5e-2), "mismatch vs JAX reference"

    print("KERNEL_OK")
</pallas_src>

<mosaic_0001>
module attributes {stable_mosaic.version = 11 : i64} {
  func.func @conv_stats_kernel(%arg0: i32, %arg1: memref<36x128xbf16, #tpu.memory_space<vmem>>, %arg2: memref<8x36xbf16, #tpu.memory_space<vmem>>, %arg3: memref<8x128xf32, #tpu.memory_space<vmem>>, %arg4: memref<8x1xf32, #tpu.memory_space<vmem>>, %arg5: memref<8x1xf32, #tpu.memory_space<vmem>>) attributes {dimension_semantics = [#tpu.dimension_semantics<arbitrary>], iteration_bounds = array<i64: 1>, scalar_prefetch = 0 : i64, scratch_operands = 0 : i64, tpu.core_type = #tpu.core_type<tc>, window_params = [{transform_indices = @transform_0, window_bounds = array<i64: 36, 128>}, {pipeline_mode = #tpu.pipeline_mode<synchronous>, transform_indices = @transform_1, window_bounds = array<i64: 8, 36>}, {transform_indices = @transform_2, window_bounds = array<i64: 8, 128>}, {pipeline_mode = #tpu.pipeline_mode<synchronous>, transform_indices = @transform_3, window_bounds = array<i64: 8, 1>}, {pipeline_mode = #tpu.pipeline_mode<synchronous>, transform_indices = @transform_4, window_bounds = array<i64: 8, 1>}]} {
    %c0 = arith.constant 0 : index
    %c0_0 = arith.constant 0 : index
    %0 = vector.load %arg2[%c0, %c0_0] : memref<8x36xbf16, #tpu.memory_space<vmem>>, vector<8x36xbf16>
    %c0_1 = arith.constant 0 : index
    %c0_2 = arith.constant 0 : index
    %1 = vector.load %arg1[%c0_1, %c0_2] : memref<36x128xbf16, #tpu.memory_space<vmem>>, vector<36x128xbf16>
    %cst = arith.constant dense<0.000000e+00> : vector<8x128xf32>
    %2 = tpu.matmul %0, %1, %cst {dimension_numbers = #tpu.dot_dimension_numbers<[1], [0], [0], [1], [0, 0, 1, 1], [], []>} : vector<8x36xbf16>, vector<36x128xbf16>, vector<8x128xf32> -> vector<8x128xf32>
    %c0_3 = arith.constant 0 : index
    %c0_4 = arith.constant 0 : index
    %3 = vector.load %arg3[%c0_3, %c0_4] : memref<8x128xf32, #tpu.memory_space<vmem>>, vector<8x128xf32>
    tpu.vector_store %arg3[%c0_3, %c0_4], %2 {strides = array<i32>} : memref<8x128xf32, #tpu.memory_space<vmem>>, vector<8x128xf32>,
    %c0_i32 = arith.constant 0 : i32
    %4 = arith.cmpi eq, %arg0, %c0_i32 : i32
    %5 = arith.extui %4 : i1 to i32
    %c0_i32_5 = arith.constant 0 : i32
    %6 = arith.cmpi ne, %5, %c0_i32_5 : i32
    scf.if %6 {
      %cst_16 = arith.constant 0.000000e+00 : f32
      %18 = vector.broadcast %cst_16 : f32 to vector<8x1xf32>
      %c0_17 = arith.constant 0 : index
      %c0_18 = arith.constant 0 : index
      %19 = vector.load %arg4[%c0_17, %c0_18] : memref<8x1xf32, #tpu.memory_space<vmem>>, vector<8x1xf32>
      tpu.vector_store %arg4[%c0_17, %c0_18], %18 {strides = array<i32>} : memref<8x1xf32, #tpu.memory_space<vmem>>, vector<8x1xf32>,
      %cst_19 = arith.constant 0.000000e+00 : f32
      %20 = vector.broadcast %cst_19 : f32 to vector<8x1xf32>
      %c0_20 = arith.constant 0 : index
      %c0_21 = arith.constant 0 : index
      %21 = vector.load %arg5[%c0_20, %c0_21] : memref<8x1xf32, #tpu.memory_space<vmem>>, vector<8x1xf32>
      tpu.vector_store %arg5[%c0_20, %c0_21], %20 {strides = array<i32>} : memref<8x1xf32, #tpu.memory_space<vmem>>, vector<8x1xf32>,
    } else {
    }
    %c0_6 = arith.constant 0 : index
    %c0_7 = arith.constant 0 : index
    %7 = vector.load %arg4[%c0_6, %c0_7] : memref<8x1xf32, #tpu.memory_space<vmem>>, vector<8x1xf32>
    %cst_8 = arith.constant dense<0.000000e+00> : vector<8xf32>
    %8 = vector.multi_reduction <add>, %2, %cst_8 [1] : vector<8x128xf32> to vector<8xf32>
    %9 = vector.shape_cast %8 : vector<8xf32> to vector<8x1xf32>
    %10 = arith.addf %7, %9 : vector<8x1xf32>
    %c0_9 = arith.constant 0 : index
    %c0_10 = arith.constant 0 : index
    %11 = vector.load %arg4[%c0_9, %c0_10] : memref<8x1xf32, #tpu.memory_space<vmem>>, vector<8x1xf32>
    tpu.vector_store %arg4[%c0_9, %c0_10], %10 {strides = array<i32>} : memref<8x1xf32, #tpu.memory_space<vmem>>, vector<8x1xf32>,
    %c0_11 = arith.constant 0 : index
    %c0_12 = arith.constant 0 : index
    %12 = vector.load %arg5[%c0_11, %c0_12] : memref<8x1xf32, #tpu.memory_space<vmem>>, vector<8x1xf32>
    %13 = arith.mulf %2, %2 : vector<8x128xf32>
    %cst_13 = arith.constant dense<0.000000e+00> : vector<8xf32>
    %14 = vector.multi_reduction <add>, %13, %cst_13 [1] : vector<8x128xf32> to vector<8xf32>
    %15 = vector.shape_cast %14 : vector<8xf32> to vector<8x1xf32>
    %16 = arith.addf %12, %15 : vector<8x1xf32>
    %c0_14 = arith.constant 0 : index
    %c0_15 = arith.constant 0 : index
    %17 = vector.load %arg5[%c0_14, %c0_15] : memref<8x1xf32, #tpu.memory_space<vmem>>, vector<8x1xf32>
    tpu.vector_store %arg5[%c0_14, %c0_15], %16 {strides = array<i32>} : memref<8x1xf32, #tpu.memory_space<vmem>>, vector<8x1xf32>,
    return
  }
  func.func @transform_0(%arg0: i32) -> (i32, i32) {
    %c0_i32 = arith.constant 0 : i32
    %c0_i32_0 = arith.constant 0 : i32
    return %c0_i32, %arg0 : i32, i32
  }
  func.func @transform_1(%arg0: i32) -> (i32, i32) {
    %c0_i32 = arith.constant 0 : i32
    %c0_i32_0 = arith.constant 0 : i32
    %c0_i32_1 = arith.constant 0 : i32
    return %c0_i32, %c0_i32_0 : i32, i32
  }
  func.func @transform_2(%arg0: i32) -> (i32, i32) {
    %c0_i32 = arith.constant 0 : i32
    %c0_i32_0 = arith.constant 0 : i32
    return %c0_i32, %arg0 : i32, i32
  }
  func.func @transform_3(%arg0: i32) -> (i32, i32) {
    %c0_i32 = arith.constant 0 : i32
    %c0_i32_0 = arith.constant 0 : i32
    %c0_i32_1 = arith.constant 0 : i32
    return %c0_i32, %c0_i32_0 : i32, i32
  }
  func.func @transform_4(%arg0: i32) -> (i32, i32) {
    %c0_i32 = arith.constant 0 : i32
    %c0_i32_0 = arith.constant 0 : i32
    %c0_i32_1 = arith.constant 0 : i32
    return %c0_i32, %c0_i32_0 : i32, i32
  }
}

</mosaic_0001>

<llo_original>
// kernel: tpu_custom_call.1
$region0: #{tpu_custom_call.1}
  #allocation0 [shape = 'u32[]', space=smem, size = 0x4, offset = 0x4, fixed_abs, tag = 'smem constant byte address 0x4 - core index']
  #allocation1 [shape = 'u32[72,128]{1,0:T(1,128)}', space=vmem, size = 0x9000, scoped, tag = 'internal scratch']
  %s0 = inlined_call_operand.hbm [shape: bf16[36,128], index: 0, kind: input, shape index: {}]
  %s1 = inlined_call_operand.hbm [shape: bf16[8,36], index: 1, kind: input, shape index: {}]
  %s2 = inlined_call_operand.hbm [shape: f32[8,128], index: 2, kind: output, shape index: {0}]
  %s3 = inlined_call_operand.vmem [shape: f32[8,1], index: 3, kind: output, shape index: {1}]
  %s4 = inlined_call_operand.vmem [shape: f32[8,1], index: 4, kind: output, shape index: {2}]
  %5 = xla_tuple %s2, %s3, %s4
  %s6 = sld [smem:[#allocation0]]
  $region46: #{tpu_custom_call.1} parent=0
    _
  %s8 = ssub.s32 1, %s6
  %s9 = scalar_select 0, %s8, %s6
  $region1: #{tpu_custom_call.1} parent=0
    #allocation2 [shape = 'u8[10240]{0}', space=vmem, size = 0x2800, scoped, tag = 'input window, operand 0, single buffered']
    #allocation3 [shape = 's32[1]{0}', space=sflag, size = 0x4, scoped, tag = 'scoped memory for tpu_custom_call.1']
    #allocation4 [shape = 's32[1]{0}', space=sflag, size = 0x4, scoped, tag = 'scoped memory for tpu_custom_call.1']
    #allocation5 [shape = 'u8[2048]{0}', space=vmem, size = 0x800, scoped, tag = 'input window, operand 1, single buffered']
    #allocation6 [shape = 's32[1]{0}', space=sflag, size = 0x4, scoped, tag = 'scoped memory for tpu_custom_call.1']
    #allocation7 [shape = 'u8[4096]{0}', space=vmem, size = 0x1000, scoped, tag = 'output window, operand 0, single buffered']
    %10 = vsyncpa [#allocation3], 0
    %11 = vsyncpa [#allocation6], 0
    %12 = vsyncpa [#allocation4], 0
    // Predicated region
    $region2: #{tpu_custom_call.1} parent=1 // pred_check
      _
    $region3: #{tpu_custom_call.1} parent=1 // pred_check_branch
      %14 = sbr.rel (0) target = $region5
    $region4: #{tpu_custom_call.1} parent=1 // pred_region
      %16 = vsyncadd [#allocation3], 0
      %s17 = sshll.u32 %s0, 4
      %s18 = int_to_ptr.hbm [resolvable:$true] %s17
      %s19 = sshll.u32 [#allocation2], 4
      %s20 = int_to_ptr.vmem [resolvable:$true] %s19
      %25 = dma.hbm_to_vmem [thread:$0]  %s18, 320, %s20, [#allocation3], 64, 64, 4
    $region5: #{tpu_custom_call.1} parent=1 // pred_fallthru
      _
    // Predicated region
    $region6: #{tpu_custom_call.1} parent=1 // pred_check
      _
    $region7: #{tpu_custom_call.1} parent=1 // pred_check_branch
      %27 = sbr.rel (0) target = $region9
    $region8: #{tpu_custom_call.1} parent=1 // pred_region
      %29 = vsyncadd [#allocation6], 0
      %s31 = sshll.u32 %s1, 4
      %s32 = int_to_ptr.hbm [resolvable:$true] %s31
      %s33 = sshll.u32 [#allocation5], 4
      %s34 = int_to_ptr.vmem [resolvable:$true] %s33
      %36 = dma.hbm_to_vmem [thread:$0]  %s32, 64, %s34, [#allocation6]
    $region9: #{tpu_custom_call.1} parent=1 // pred_fallthru
      _
    // Predicated region
    $region10: #{tpu_custom_call.1} parent=1 // pred_check
      _
    $region11: #{tpu_custom_call.1} parent=1 // pred_check_branch
      %38 = sbr.rel (0) target = $region13
    $region12: #{tpu_custom_call.1} parent=1 // pred_region
      %40 = dma.done [#allocation3], 320
    $region13: #{tpu_custom_call.1} parent=1 // pred_fallthru
      _
    // Predicated region
    $region14: #{tpu_custom_call.1} parent=1 // pred_check
      _
    $region15: #{tpu_custom_call.1} parent=1 // pred_check_branch
      %42 = sbr.rel (0) target = $region17
    $region16: #{tpu_custom_call.1} parent=1 // pred_region
      %44 = dma.done [#allocation6], 64
    $region17: #{tpu_custom_call.1} parent=1 // pred_fallthru
      _
    %v46 = vld [vmem:[#allocation5] sm:$0xf]
    %v47 = vld [vmem:[#allocation2] sm:$0xf]
    %v48 = vld [vmem:[#allocation2 + $0x4] sm:$0xf]
    %v49 = vld [vmem:[#allocation2 + $0x8] sm:$0xf]
    %v50 = vld [vmem:[#allocation2 + $0xc] sm:$0xf]
    %v51 = vld [vmem:[#allocation2 + $0x10] sm:$0x3]
    %v57 = vunpack.c.l.b16 %v47
    %v58 = vunpack.c.l.b16 %v48
    %v59 = vunpack.c.l.b16 %v49
    %v60 = vunpack.c.l.b16 %v50
    %v61 = vunpack.c.l.b16 %v51
    %v62 = vpack.c.b16 %v58, %v57
    %v63 = vpack.c.b16 %v60, %v59
    %v64 = vpack.c.b16 %v61, %v61
    %vm67 = vcmask 293888
    %v69 = vsel %vm67, %v46, 0
    %vm71 = vcmask 1041408
    %v73 = vsel %vm71, %v64, 0
    %75 = vmatpush.bf16.msra.mxu0 0
    %76 = vmatpush.bf16.msra.mxu0 0
    %77 = vmatpush.bf16.msra.mxu0 0
    %78 = vmatpush.bf16.msra.mxu0 0
    %79 = vmatpush.bf16.msra.mxu0 0
    %80 = vmatpush.bf16.msra.mxu0 %v73
    %81 = vmatpush.bf16.msra.mxu0 %v63
    %82 = vmatpush.bf16.msra.mxu0 %v62
    %83 = vmatmul.bf16.gmra.mxu0 %v69
    %v84 = vpop.f32.mrf.mxu0
    %v85 = vadd.f32 0.0, %v84
    %v86 = vpop.f32.mrf.mxu0
    %87 = vdwg.mxu0
    %88 = vst [vmem:[#allocation7] sm:$0xff] %v85
    %p89 = scmp.eq.s32.totalorder 0, 0
    // Predicated region
    $region18: #{tpu_custom_call.1} parent=1 // pred_check
      %p90 = pneg %p89
    $region19: #{tpu_custom_call.1} parent=1 // pred_check_branch
      %92 = sbr.rel (%p90) target = $region21
    $region20: #{tpu_custom_call.1} parent=1 // pred_region
      %vm93 = vcmask 7168
      %94 = vst.msk [vmem:[%s3] sm:$0xff] %vm93, 0.0
      %95 = vst.msk [vmem:[%s4] sm:$0xff] %vm93, 0.0
    $region21: #{tpu_custom_call.1} parent=1 // pred_fallthru
      _
    %v96 = vld [vmem:[%s3] sm:$0xff]
    %97 = vadd.xlane.f32.xlu0 %v85
    %v98 = vpop.xlane.xlu0 %97
    %v99 = vadd.f32 %v96, %v98
    %vm100 = vcmask 7168
    %101 = vst.msk [vmem:[%s3] sm:$0xff] %vm100, %v99
    %v102 = vld [vmem:[%s4] sm:$0xff]
    %v103 = vmul.f32 %v85, %v85
    %104 = vadd.xlane.f32.xlu0 %v103
    %v105 = vpop.xlane.xlu0 %104
    %v106 = vadd.f32 %v102, %v105
    %107 = vst.msk [vmem:[%s4] sm:$0xff] %vm100, %v106
    // Predicated region
    $region22: #{tpu_custom_call.1} parent=1 // pred_check
      _
    $region23: #{tpu_custom_call.1} parent=1 // pred_check_branch
      %109 = sbr.rel (0) target = $region25
    $region24: #{tpu_custom_call.1} parent=1 // pred_region
      %111 = vsyncadd [#allocation4], 0
      %s113 = sshll.u32 [#allocation7], 4
      %s114 = int_to_ptr.vmem [resolvable:$true] %s113
      %s115 = sshll.u32 %s2, 4
      %s116 = int_to_ptr.hbm [resolvable:$true] %s115
      %118 = dma.vmem_to_hbm [thread:$0]  %s114, 128, %s116, [#allocation4]
    $region25: #{tpu_custom_call.1} parent=1 // pred_fallthru
      _
    // Predicated region
    $region26: #{tpu_custom_call.1} parent=1 // pred_check
      _
    $region27: #{tpu_custom_call.1} parent=1 // pred_check_branch
      %120 = sbr.rel (0) target = $region29
    $region28: #{tpu_custom_call.1} parent=1 // pred_region
      _
    $region29: #{tpu_custom_call.1} parent=1 // pred_fallthru
      _
    // Predicated region
    $region30: #{tpu_custom_call.1} parent=1 // pred_check
      _
    $region31: #{tpu_custom_call.1} parent=1 // pred_check_branch
      %122 = sbr.rel (0) target = $region33
    $region32: #{tpu_custom_call.1} parent=1 // pred_region
      _
    $region33: #{tpu_custom_call.1} parent=1 // pred_fallthru
      _
    // Predicated region
    $region34: #{tpu_custom_call.1} parent=1 // pred_check
      _
    $region35: #{tpu_custom_call.1} parent=1 // pred_check_branch
      %124 = sbr.rel (0) target = $region37
    $region36: #{tpu_custom_call.1} parent=1 // pred_region
      %126 = dma.done [#allocation4], 128
    $region37: #{tpu_custom_call.1} parent=1 // pred_fallthru
      _
    // Predicated region
    $region38: #{tpu_custom_call.1} parent=1 // pred_check
      _
    $region39: #{tpu_custom_call.1} parent=1 // pred_check_branch
      %128 = sbr.rel (0) target = $region41
    $region40: #{tpu_custom_call.1} parent=1 // pred_region
      _
    $region41: #{tpu_custom_call.1} parent=1 // pred_fallthru
      _
    // Predicated region
    $region42: #{tpu_custom_call.1} parent=1 // pred_check
      _
    $region43: #{tpu_custom_call.1} parent=1 // pred_check_branch
      %130 = sbr.rel (0) target = $region45
    $region44: #{tpu_custom_call.1} parent=1 // pred_region
      _
    $region45: #{tpu_custom_call.1} parent=1 // pred_fallthru
      _
    %131 = vsyncpa [#allocation3], 1
    %132 = vsyncpa [#allocation6], 1
    %133 = vsyncpa [#allocation4], 1

</llo_original>
